<compile_context>
chip_gen: v7x
topology: tpu7x:2x2x1
jax: 0.10.0
libtpu: 0.0.40
codegen_flags: <defaults>
</compile_context>

<pallas_src>
import functools
import math

import jax
import jax.numpy as jnp
from jax import lax
from jax.experimental import pallas as pl
from jax.experimental.pallas import tpu as pltpu


def _layer_norm_kernel(x_ref, gamma_ref, beta_ref, o_ref, *, eps):
    # x_ref: (tm, d_model) tile of flattened rows; gamma/beta: (1, d_model).
    x = x_ref[...].astype(jnp.float32)

    mean = jnp.mean(x, axis=-1, keepdims=True)                   # XLU lane reduce
    centered = x - mean
    var = jnp.mean(centered * centered, axis=-1, keepdims=True)  # unbiased=False
    var = jnp.maximum(var, eps)                                  # clamp(min=eps)
    inv = lax.rsqrt(var + eps)                                   # EUP rsqrt

    if o_ref.dtype == jnp.bfloat16:
        # Packed bf16 affine epilogue (halves VALU element cost on v7x);
        # statistics stay in f32 above.
        norm_bf16 = (centered * inv).astype(jnp.bfloat16)
        gamma = gamma_ref[...].astype(jnp.bfloat16)
        beta = beta_ref[...].astype(jnp.bfloat16)
        o_ref[...] = gamma * norm_bf16 + beta
    else:
        gamma = gamma_ref[...].astype(jnp.float32)
        beta = beta_ref[...].astype(jnp.float32)
        # Fused epilogue: no separate `norm` temporary.
        o_ref[...] = (gamma * (centered * inv) + beta).astype(o_ref.dtype)


def _round_up(v, m):
    return ((v + m - 1) // m) * m


def layer_norm(x, gamma, beta, *, eps=1e-10):
    """LayerNorm over the last dim. x: (..., d_model); returns same shape/dtype."""
    orig_shape = x.shape
    d_model = orig_shape[-1]
    M = math.prod(orig_shape[:-1]) if len(orig_shape) > 1 else 1
    x2d = x.reshape(M, d_model)

    itemsize = jnp.dtype(x.dtype).itemsize
    # dtype-native sublane packing: 8 rows for f32, 16 for bf16, 32 for int8/fp8.
    pack = 8 * max(1, 4 // itemsize)

    # --- Row-tile selection -------------------------------------------------
    # Target ~2 MiB per (io-dtype) input block, rows clamped to [256, 2048].
    target_block_bytes = 2 * 1024 * 1024
    tm = max(256, min(2048, target_block_bytes // max(1, d_model * itemsize)))
    tm = _round_up(int(tm), pack)
    # Keep >= 2 grid steps when M allows (megacore sharding on v7x).
    if M > pack:
        tm = min(tm, _round_up(pl.cdiv(M, 2), pack))
    tm = max(pack, min(tm, _round_up(M, pack)))

    # --- Generation-aware VMEM budget ---------------------------------------
    try:
        kind = jax.devices()[0].device_kind.lower()
    except Exception:  # pragma: no cover
        kind = ""
    phys_vmem = (64 if "v7" in kind else 128) * 1024 * 1024
    vmem_cap = (phys_vmem * 3) // 4  # ~48 MiB on v7x, ~96 MiB on v5e/v6e

    def footprint(rows):
        io_block = rows * d_model * itemsize
        f32_block = rows * d_model * 4
        params = 2 * d_model * 4
        # 2x double-buffered (in + out) io blocks, ~3 live f32 temporaries,
        # params, ~2 MiB headroom.
        return 2 * 2 * io_block + 3 * f32_block + 2 * params + (2 << 20)

    while footprint(tm) > vmem_cap and tm > pack:
        tm = max(pack, _round_up(tm // 2, pack))

    vmem_bytes = int(min(vmem_cap, max(16 << 20, footprint(tm))))

    gamma_2d = gamma.reshape(1, d_model)
    beta_2d = beta.reshape(1, d_model)

    grid = (pl.cdiv(M, tm),)  # partial boundary block handled by Pallas

    out2d = pl.pallas_call(
        functools.partial(_layer_norm_kernel, eps=eps),
        out_shape=jax.ShapeDtypeStruct((M, d_model), x.dtype),
        grid_spec=pltpu.PrefetchScalarGridSpec(
            num_scalar_prefetch=0,
            grid=grid,
            in_specs=[
                pl.BlockSpec((tm, d_model), lambda i: (i, 0)),  # x rows
                pl.BlockSpec((1, d_model), lambda i: (0, 0)),   # gamma (resident)
                pl.BlockSpec((1, d_model), lambda i: (0, 0)),   # beta  (resident)
            ],
            out_specs=pl.BlockSpec((tm, d_model), lambda i: (i, 0)),
        ),
        compiler_params=pltpu.CompilerParams(
            dimension_semantics=("parallel",),
            vmem_limit_bytes=vmem_bytes),
    )(x2d, gamma_2d, beta_2d)

    return out2d.reshape(orig_shape)


def _reference(x, gamma, beta, eps):
    mean = x.mean(axis=-1, keepdims=True)
    var = ((x - mean) ** 2).mean(axis=-1, keepdims=True)  # unbiased=False
    var = jnp.maximum(var, eps)                            # clamp(min=eps)
    return gamma * (x - mean) / jnp.sqrt(var + eps) + beta


if __name__ == "__main__":
    eps = 1e-10
    key = jax.random.PRNGKey(0)
    kx, kg, kb, kx2 = jax.random.split(key, 4)

    d_model = 128  # multiple of 128 -> lane-dense (unmasked) stores
    gamma = 1.0 + 0.1 * jax.random.normal(kg, (d_model,), jnp.float32)
    beta = 0.1 * jax.random.normal(kb, (d_model,), jnp.float32)

    # Case 1: regular shape (M divisible by the row tile).
    x = jax.random.normal(kx, (2, 8, d_model), jnp.float32)
    out = jax.block_until_ready(layer_norm(x, gamma, beta, eps=eps))
    assert out.shape == x.shape
    assert jnp.allclose(out, _reference(x, gamma, beta, eps), atol=1e-5, rtol=1e-5)

    # Case 2: ragged M (exercises the partial boundary block with no pad/slice).
    x2 = jax.random.normal(kx2, (3, 5, d_model), jnp.float32)
    out2 = jax.block_until_ready(layer_norm(x2, gamma, beta, eps=eps))
    assert out2.shape == x2.shape
    assert jnp.allclose(out2, _reference(x2, gamma, beta, eps), atol=1e-5, rtol=1e-5)

    print("KERNEL_OK")
</pallas_src>

<mosaic_0001>
module attributes {stable_mosaic.version = 11 : i64} {
  func.func @_layer_norm_kernel(%arg0: i32, %arg1: memref<8x128xf32, #tpu.memory_space<vmem>>, %arg2: memref<1x128xf32, #tpu.memory_space<vmem>>, %arg3: memref<1x128xf32, #tpu.memory_space<vmem>>, %arg4: memref<8x128xf32, #tpu.memory_space<vmem>>) attributes {dimension_semantics = [#tpu.dimension_semantics<parallel>], iteration_bounds = array<i64: 2>, scalar_prefetch = 0 : i64, scratch_operands = 0 : i64, tpu.core_type = #tpu.core_type<tc>, window_params = [{transform_indices = @transform_0, window_bounds = array<i64: 8, 128>}, {pipeline_mode = #tpu.pipeline_mode<synchronous>, transform_indices = @transform_1, window_bounds = array<i64: 1, 128>}, {pipeline_mode = #tpu.pipeline_mode<synchronous>, transform_indices = @transform_2, window_bounds = array<i64: 1, 128>}, {transform_indices = @transform_3, window_bounds = array<i64: 8, 128>}]} {
    %c0 = arith.constant 0 : index
    %c0_0 = arith.constant 0 : index
    %0 = vector.load %arg1[%c0, %c0_0] : memref<8x128xf32, #tpu.memory_space<vmem>>, vector<8x128xf32>
    %cst = arith.constant dense<0.000000e+00> : vector<8xf32>
    %1 = vector.multi_reduction <add>, %0, %cst [1] : vector<8x128xf32> to vector<8xf32>
    %2 = vector.shape_cast %1 : vector<8xf32> to vector<8x1xf32>
    %cst_1 = arith.constant 1.280000e+02 : f32
    %3 = vector.broadcast %cst_1 : f32 to vector<8x1xf32>
    %4 = arith.divf %2, %3 : vector<8x1xf32>
    %5 = vector.broadcast %4 : vector<8x1xf32> to vector<8x128xf32>
    %6 = arith.subf %0, %5 : vector<8x128xf32>
    %7 = arith.mulf %6, %6 : vector<8x128xf32>
    %cst_2 = arith.constant dense<0.000000e+00> : vector<8xf32>
    %8 = vector.multi_reduction <add>, %7, %cst_2 [1] : vector<8x128xf32> to vector<8xf32>
    %9 = vector.shape_cast %8 : vector<8xf32> to vector<8x1xf32>
    %cst_3 = arith.constant 1.280000e+02 : f32
    %10 = vector.broadcast %cst_3 : f32 to vector<8x1xf32>
    %11 = arith.divf %9, %10 : vector<8x1xf32>
    %cst_4 = arith.constant 1.000000e-10 : f32
    %12 = vector.broadcast %cst_4 : f32 to vector<8x1xf32>
    %13 = arith.maximumf %11, %12 : vector<8x1xf32>
    %cst_5 = arith.constant 1.000000e-10 : f32
    %14 = vector.broadcast %cst_5 : f32 to vector<8x1xf32>
    %15 = arith.addf %13, %14 : vector<8x1xf32>
    %16 = math.rsqrt %15 : vector<8x1xf32>
    %c0_6 = arith.constant 0 : index
    %c0_7 = arith.constant 0 : index
    %17 = vector.load %arg2[%c0_6, %c0_7] : memref<1x128xf32, #tpu.memory_space<vmem>>, vector<1x128xf32>
    %c0_8 = arith.constant 0 : index
    %c0_9 = arith.constant 0 : index
    %18 = vector.load %arg3[%c0_8, %c0_9] : memref<1x128xf32, #tpu.memory_space<vmem>>, vector<1x128xf32>
    %19 = vector.broadcast %16 : vector<8x1xf32> to vector<8x128xf32>
    %20 = arith.mulf %6, %19 : vector<8x128xf32>
    %21 = vector.broadcast %17 : vector<1x128xf32> to vector<8x128xf32>
    %22 = arith.mulf %21, %20 : vector<8x128xf32>
    %23 = vector.broadcast %18 : vector<1x128xf32> to vector<8x128xf32>
    %24 = arith.addf %22, %23 : vector<8x128xf32>
    %c0_10 = arith.constant 0 : index
    %c0_11 = arith.constant 0 : index
    %25 = vector.load %arg4[%c0_10, %c0_11] : memref<8x128xf32, #tpu.memory_space<vmem>>, vector<8x128xf32>
    tpu.vector_store %arg4[%c0_10, %c0_11], %24 {strides = array<i32>} : memref<8x128xf32, #tpu.memory_space<vmem>>, vector<8x128xf32>,
    return
  }
  func.func @transform_0(%arg0: i32) -> (i32, i32) {
    %c0_i32 = arith.constant 0 : i32
    %c0_i32_0 = arith.constant 0 : i32
    return %arg0, %c0_i32 : i32, i32
  }
  func.func @transform_1(%arg0: i32) -> (i32, i32) {
    %c0_i32 = arith.constant 0 : i32
    %c0_i32_0 = arith.constant 0 : i32
    %c0_i32_1 = arith.constant 0 : i32
    return %c0_i32, %c0_i32_0 : i32, i32
  }
  func.func @transform_2(%arg0: i32) -> (i32, i32) {
    %c0_i32 = arith.constant 0 : i32
    %c0_i32_0 = arith.constant 0 : i32
    %c0_i32_1 = arith.constant 0 : i32
    return %c0_i32, %c0_i32_0 : i32, i32
  }
  func.func @transform_3(%arg0: i32) -> (i32, i32) {
    %c0_i32 = arith.constant 0 : i32
    %c0_i32_0 = arith.constant 0 : i32
    return %arg0, %c0_i32 : i32, i32
  }
}

</mosaic_0001>

<llo_original>
// kernel: tpu_custom_call.1
$region0: #{tpu_custom_call.1}
  #allocation0 [shape = 'u32[]', space=smem, size = 0x4, offset = 0x4, fixed_abs, tag = 'smem constant byte address 0x4 - core index']
  #allocation1 [shape = 'u32[144,128]{1,0:T(1,128)}', space=vmem, size = 0x12000, scoped, tag = 'internal scratch']
  %s0 = inlined_call_operand.hbm [shape: f32[16,128], index: 0, kind: input, shape index: {}]
  %s1 = inlined_call_operand.vmem [shape: f32[1,128], index: 1, kind: input, shape index: {}]
  %s2 = inlined_call_operand.vmem [shape: f32[1,128], index: 2, kind: input, shape index: {}]
  %s3 = inlined_call_operand.hbm [shape: f32[16,128], index: 3, kind: output, shape index: {}]
  %s4 = sld [smem:[#allocation0]]
  $region49: #{tpu_custom_call.1} parent=0
    _
  %s6 = ssub.s32 1, %s4
  %s7 = scalar_select 0, %s6, %s4
  $region1: #{tpu_custom_call.1} parent=0
    #allocation2 [shape = 'u8[8192]{0}', space=vmem, size = 0x2000, scoped, tag = 'input window, operand 0']
    #allocation3 [shape = 's32[2]{0}', space=sflag, size = 0x8, scoped, tag = 'scoped memory for tpu_custom_call.1']
    #allocation4 [shape = 's32[2]{0}', space=sflag, size = 0x8, scoped, tag = 'scoped memory for tpu_custom_call.1']
    #allocation5 [shape = 'u8[8192]{0}', space=vmem, size = 0x2000, scoped, tag = 'output window, operand 0']
    %8 = vsyncpa [#allocation3], 0
    %s9 = scalar_lea.sflag [#allocation3], 1
    %10 = vsyncpa %s9, 0
    %11 = vsyncpa [#allocation4], 0
    %s12 = scalar_lea.sflag [#allocation4], 1
    %13 = vsyncpa %s12, 0
    loop: start=0, step=1, limit=4
    $region2: #{tpu_custom_call.1} parent=1 // loop_pre_header
      _
    $region3: #{tpu_custom_call.1} parent=1 // loop_header
      %s15 = sphi 0, %s19
      %p16 = scmp.ge.s32.totalorder %s15, 4
      %s25 = sphi 0, %s27
      %s28 = sphi 0, %s25
      %s29 = sphi 0, %s28
      %s45 = sphi 0, %s29
      %s49 = sphi 0, %s49
      %s51 = sphi 0, %s49
      %s52 = sphi 0, %s51
      %s66 = sphi 0, %s52
      %s70 = sphi 0, %s70
      %s72 = sphi 0, %s70
      %s73 = sphi 0, %s72
      %s87 = sphi 0, %s73
      %s93 = sphi 0, %s95
      %s96 = sphi 0, %s93
      %s97 = sphi 0, %s96
      %s113 = sphi 0, %s97
    $region4: #{tpu_custom_call.1} parent=1 // loop_header_branch
      %18 = sbr.rel (%p16) target = $region8
    $region5: #{tpu_custom_call.1} parent=1 // loop_body
      %s20 = ssub.s32 %s15, 1
      %s21 = ssub.s32 %s15, 2
      %s22 = sadd.s32 %s15, 1
      %s23 = ssub.s32 %s15, %s22
      %p24 = scmp.eq.s32.totalorder %s23, 0
      %s26 = sadd.s32 %s25, 1
      %s27 = scalar_select %p24, %s25, %s26
      %p30 = pneg %p24
      %p31 = scmp.eq.s32.totalorder %s15, 1
      %p32 = por %p30, %p31
      %p33 = scmp.ne.s32.totalorder %s25, %s28
      %p34 = scmp.eq.s32.totalorder %s15, 0
      %p35 = por %p33, %p34
      %p36 = scmp.ne.s32.totalorder %s25, %s28
      %p37 = scmp.eq.s32.totalorder %s20, 1
      %p38 = por %p36, %p37
      %p39 = scmp.ne.s32.totalorder %s28, %s29
      %p40 = scmp.eq.s32.totalorder %s20, 0
      %p41 = por %p39, %p40
      %p42 = scmp.ne.s32.totalorder %s28, %s29
      %p43 = scmp.eq.s32.totalorder %s21, 1
      %p44 = por %p42, %p43
      %p46 = scmp.ne.s32.totalorder %s29, %s45
      %p47 = scmp.eq.s32.totalorder %s21, 0
      %p48 = por %p46, %p47
      %s50 = sadd.s32 %s49, 1
      %p53 = scmp.eq.s32.totalorder %s15, 1
      %p54 = scmp.ne.s32.totalorder %s49, %s51
      %p55 = scmp.eq.s32.totalorder %s15, 0
      %p56 = por %p54, %p55
      %p57 = scmp.ne.s32.totalorder %s49, %s51
      %p58 = scmp.eq.s32.totalorder %s20, 1
      %p59 = por %p57, %p58
      %p60 = scmp.ne.s32.totalorder %s51, %s52
      %p61 = scmp.eq.s32.totalorder %s20, 0
      %p62 = por %p60, %p61
      %p63 = scmp.ne.s32.totalorder %s51, %s52
      %p64 = scmp.eq.s32.totalorder %s21, 1
      %p65 = por %p63, %p64
      %p67 = scmp.ne.s32.totalorder %s52, %s66
      %p68 = scmp.eq.s32.totalorder %s21, 0
      %p69 = por %p67, %p68
      %s71 = sadd.s32 %s70, 1
      %p74 = scmp.eq.s32.totalorder %s15, 1
      %p75 = scmp.ne.s32.totalorder %s70, %s72
      %p76 = scmp.eq.s32.totalorder %s15, 0
      %p77 = por %p75, %p76
      %p78 = scmp.ne.s32.totalorder %s70, %s72
      %p79 = scmp.eq.s32.totalorder %s20, 1
      %p80 = por %p78, %p79
      %p81 = scmp.ne.s32.totalorder %s72, %s73
      %p82 = scmp.eq.s32.totalorder %s20, 0
      %p83 = por %p81, %p82
      %p84 = scmp.ne.s32.totalorder %s72, %s73
      %p85 = scmp.eq.s32.totalorder %s21, 1
      %p86 = por %p84, %p85
      %p88 = scmp.ne.s32.totalorder %s73, %s87
      %p89 = scmp.eq.s32.totalorder %s21, 0
      %p90 = por %p88, %p89
      %s91 = ssub.s32 %s15, %s22
      %p92 = scmp.eq.s32.totalorder %s91, 0
      %s94 = sadd.s32 %s93, 1
      %s95 = scalar_select %p92, %s93, %s94
      %p98 = pneg %p92
      %p99 = scmp.eq.s32.totalorder %s15, 1
      %p100 = por %p98, %p99
      %p101 = scmp.ne.s32.totalorder %s93, %s96
      %p102 = scmp.eq.s32.totalorder %s15, 0
      %p103 = por %p101, %p102
      %p104 = scmp.ne.s32.totalorder %s93, %s96
      %p105 = scmp.eq.s32.totalorder %s20, 1
      %p106 = por %p104, %p105
      %p107 = scmp.ne.s32.totalorder %s96, %s97
      %p108 = scmp.eq.s32.totalorder %s20, 0
      %p109 = por %p107, %p108
      %p110 = scmp.ne.s32.totalorder %s96, %s97
      %p111 = scmp.eq.s32.totalorder %s21, 1
      %p112 = por %p110, %p111
      %p114 = scmp.ne.s32.totalorder %s97, %s113
      %p115 = scmp.eq.s32.totalorder %s21, 0
      %p116 = por %p114, %p115
      %p117 = scmp.le.s32.totalorder 1, %s15
      %p118 = scmp.lt.s32.totalorder %s15, 3
      %p119 = pnand %p117, %p118
      %p120 = pneg %p119
      // Predicated region
      $region9: #{tpu_custom_call.1} parent=5 // pred_check
        _
      $region10: #{tpu_custom_call.1} parent=5 // pred_check_branch
        %122 = sbr.rel (%p119) target = $region12
      $region11: #{tpu_custom_call.1} parent=5 // pred_region
        %s123 = ssub.s32 %s15, 1
        // Predicated region
        $region13: #{tpu_custom_call.1} parent=11 // pred_check
          %p124 = pneg %p62
        $region14: #{tpu_custom_call.1} parent=11 // pred_check_branch
          %126 = sbr.rel (%p124) target = $region16
        $region15: #{tpu_custom_call.1} parent=11 // pred_region
          _
        $region16: #{tpu_custom_call.1} parent=11 // pred_fallthru
          _
        // Predicated region
        $region17: #{tpu_custom_call.1} parent=11 // pred_check
          %p127 = pneg %p83
        $region18: #{tpu_custom_call.1} parent=11 // pred_check_branch
          %129 = sbr.rel (%p127) target = $region20
        $region19: #{tpu_custom_call.1} parent=11 // pred_region
          _
        $region20: #{tpu_custom_call.1} parent=11 // pred_fallthru
          _
      $region12: #{tpu_custom_call.1} parent=5 // pred_fallthru
        _
      %p130 = scmp.lt.s32.totalorder %s15, 2
      // Predicated region
      $region21: #{tpu_custom_call.1} parent=5 // pred_check
        %p131 = pneg %p130
      $region22: #{tpu_custom_call.1} parent=5 // pred_check_branch
        %133 = sbr.rel (%p131) target = $region24
      $region23: #{tpu_custom_call.1} parent=5 // pred_region
        // Predicated region
        $region25: #{tpu_custom_call.1} parent=23 // pred_check
          %p134 = pneg %p35
        $region26: #{tpu_custom_call.1} parent=23 // pred_check_branch
          %136 = sbr.rel (%p134) target = $region28
        $region27: #{tpu_custom_call.1} parent=23 // pred_region
          %s137 = sand.u32 %s25, 1
          %s138 = scalar_lea.sflag [#allocation3], %s137
          %s139 = sand.u32 %s25, 1
          %s140 = smul.addr %s139, 8
          %s141 = scalar_lea.vmem [#allocation2], %s140
          %s143 = ssub.s32 128, 128
          %144 = vsyncadd %s138, %s143
          %s145 = smul.addr %s15, 128
          %s146 = scalar_lea.hbm %s0, %s145
          %s148 = sshll.u32 %s141, 4
          %s149 = int_to_ptr.vmem [resolvable:$true] %s148
          %151 = dma.hbm_to_vmem [thread:$0]  %s146, 128, %s149, %s138
        $region28: #{tpu_custom_call.1} parent=23 // pred_fallthru
          _
      $region24: #{tpu_custom_call.1} parent=5 // pred_fallthru
        _
      %p152 = scmp.le.s32.totalorder 1, %s15
      %p153 = scmp.lt.s32.totalorder %s15, 3
      %p154 = pnand %p152, %p153
      %p155 = pneg %p154
      // Predicated region
      $region29: #{tpu_custom_call.1} parent=5 // pred_check
        _
      $region30: #{tpu_custom_call.1} parent=5 // pred_check_branch
        %157 = sbr.rel (%p154) target = $region32
      $region31: #{tpu_custom_call.1} parent=5 // pred_region
        %s158 = ssub.s32 %s15, 1
        %s159 = sand.u32 %s28, 1
        %s160 = scalar_lea.sflag [#allocation3], %s159
        %s161 = sand.u32 %s28, 1
        %s162 = smul.addr %s161, 8
        %s163 = scalar_lea.vmem [#allocation2], %s162
        // Predicated region
        $region33: #{tpu_custom_call.1} parent=31 // pred_check
          %p164 = pneg %p41
        $region34: #{tpu_custom_call.1} parent=31 // pred_check_branch
          %166 = sbr.rel (%p164) target = $region36
        $region35: #{tpu_custom_call.1} parent=31 // pred_region
          %167 = dma.done %s160, 128
        $region36: #{tpu_custom_call.1} parent=31 // pred_fallthru
          _
        %s168 = sand.u32 %s28, 1
        %s169 = scalar_lea.sflag [#allocation3], %s168
        %s170 = sand.u32 %s28, 1
        %s171 = smul.addr %s170, 8
        %s172 = scalar_lea.vmem [#allocation2], %s171
        %p173 = pneg %p41
        %p174 = pneg %p38
        %p175 = pneg %p62
        %p176 = pneg %p59
        %p177 = pneg %p83
        %p178 = pneg %p80
        %p179 = pneg %p109
        %p180 = pneg %p106
        %s181 = sand.u32 %s96, 1
        %s182 = scalar_lea.sflag [#allocation4], %s181
        %s183 = sand.u32 %s96, 1
        %s184 = smul.addr %s183, 8
        %s185 = scalar_lea.vmem [#allocation5], %s184
        %v186 = vld [vmem:[%s163] sm:$0xff]
        %187 = vadd.xlane.f32.xlu0 %v186
        %v188 = vpop.xlane.xlu0 %187
        %v189 = vrcp.pop 128.0
        %v190 = vmul.f32 %v188, %v189
        %v191 = vsub.f32 %v186, %v190
        %v192 = vmul.f32 %v191, %v191
        %193 = vadd.xlane.f32.xlu0 %v192
        %v194 = vpop.xlane.xlu0 %193
        %v195 = vmul.f32 %v194, %v189
        %v196 = vmax.f32 %v195, 1e-10
        %v197 = vadd.f32 %v196, 1e-10
        %v198 = vrsqrt.pop %v197
        %v199 = vld [vmem:[%s1] sm:$0x1]
        %v200 = vld [vmem:[%s2] sm:$0x1]
        %v201 = vmul.f32 %v191, %v198
        %v203 = vlaneseq
        %v204 = vshrl.u32 %v203, 7
        %v205 = vsub.s32 0, %v204
        %v206 = vrot.slane %v199, %v205
        %v208 = vmul.f32 %v206, %v201
        %v210 = vlaneseq
        %v211 = vshrl.u32 %v210, 7
        %v212 = vsub.s32 0, %v211
        %v213 = vrot.slane %v200, %v212
        %v215 = vadd.f32 %v208, %v213
        %216 = vst [vmem:[%s185] sm:$0xff] %v215
        %s217 = sand.u32 %s96, 1
        %s218 = scalar_lea.sflag [#allocation4], %s217
        %s219 = sand.u32 %s96, 1
        %s220 = smul.addr %s219, 8
        %s221 = scalar_lea.vmem [#allocation5], %s220
        // Predicated region
        $region37: #{tpu_custom_call.1} parent=31 // pred_check
          %p222 = pneg %p106
        $region38: #{tpu_custom_call.1} parent=31 // pred_check_branch
          %224 = sbr.rel (%p222) target = $region40
        $region39: #{tpu_custom_call.1} parent=31 // pred_region
          %s226 = ssub.s32 128, 128
          %227 = vsyncadd %s218, %s226
          %s228 = smul.addr %s20, 128
          %s229 = scalar_lea.hbm %s3, %s228
          %s231 = sshll.u32 %s221, 4
          %s232 = int_to_ptr.vmem [resolvable:$true] %s231
          %234 = dma.vmem_to_hbm [thread:$0]  %s232, 128, %s229, %s218
        $region40: #{tpu_custom_call.1} parent=31 // pred_fallthru
          _
      $region32: #{tpu_custom_call.1} parent=5 // pred_fallthru
        _
      %p235 = scmp.le.s32.totalorder 2, %s15
      // Predicated region
      $region41: #{tpu_custom_call.1} parent=5 // pred_check
        %p236 = pneg %p235
      $region42: #{tpu_custom_call.1} parent=5 // pred_check_branch
        %238 = sbr.rel (%p236) target = $region44
      $region43: #{tpu_custom_call.1} parent=5 // pred_region
        %s239 = ssub.s32 %s15, 2
        // Predicated region
        $region45: #{tpu_custom_call.1} parent=43 // pred_check
          %p240 = pneg %p112
        $region46: #{tpu_custom_call.1} parent=43 // pred_check_branch
          %242 = sbr.rel (%p240) target = $region48
        $region47: #{tpu_custom_call.1} parent=43 // pred_region
          %s243 = sand.u32 %s97, 1
          %s244 = scalar_lea.sflag [#allocation4], %s243
          %s245 = sand.u32 %s97, 1
          %s246 = smul.addr %s245, 8
          %s247 = scalar_lea.vmem [#allocation5], %s246
          %248 = dma.done %s244, 128
        $region48: #{tpu_custom_call.1} parent=43 // pred_fallthru
          _
      $region44: #{tpu_custom_call.1} parent=5 // pred_fallthru
        _
    $region6: #{tpu_custom_call.1} parent=1 // loop_footer
      %s19 = sadd.s32 1, %s15
    $region7: #{tpu_custom_call.1} parent=1 // loop_footer_branch
      %14 = sbr.rel target = $region3
    $region8: #{tpu_custom_call.1} parent=1 // loop_exit
      _
    %249 = vsyncpa [#allocation3], 1
    %s250 = scalar_lea.sflag [#allocation3], 1
    %251 = vsyncpa %s250, 1
    %252 = vsyncpa [#allocation4], 1
    %s253 = scalar_lea.sflag [#allocation4], 1
    %254 = vsyncpa %s253, 1

</llo_original>
